<compile_context>
chip_gen: v6e
topology: v6e:2x2x1
jax: 0.10.0
libtpu: 0.0.40
codegen_flags: <defaults>
</compile_context>

<pallas_src>
import jax
import jax.numpy as jnp
from jax.experimental import pallas as pl
from jax.experimental.pallas import tpu as pltpu


def _normalize_kernel(x_ref, scale_ref, bias_ref, o_ref):
    # x_ref:     (row_tile, hw_tile)   lane-dense data tile
    # scale_ref: (rows_padded, 1)      VMEM-resident per-row 1/std      (f32)
    # bias_ref:  (rows_padded, 1)      VMEM-resident per-row -mean/std  (f32)
    # o_ref:     (row_tile, hw_tile)
    row_tile = x_ref.shape[0]
    r0 = pl.multiple_of(pl.program_id(0) * row_tile, row_tile)
    s = scale_ref[pl.ds(r0, row_tile), :]          # (row_tile, 1)
    b = bias_ref[pl.ds(r0, row_tile), :]
    x = x_ref[...].astype(jnp.float32)
    # sublane->lane splat broadcast; single VPU mul + add per vreg.
    o_ref[...] = (x * s + b).astype(o_ref.dtype)


def _tile_target_bytes():
    """Per-tile byte target, picked per TPU generation (HBM BW vs VMEM size)."""
    kind = ""
    try:
        kind = jax.devices()[0].device_kind.lower()
    except Exception:
        pass
    if "v5" in kind:      # ~820 GB/s HBM; modest tiles already amortize step cost
        return 3 << 20
    if "v6" in kind:      # ~1.4 TB/s HBM, 128 MiB VMEM: plenty of headroom
        return 6 << 20
    if "v7" in kind:      # ~3.2 TB/s HBM but only 64 MiB VMEM per TC
        return 5 << 20
    return 4 << 20


def normalize(x, mean, std):
    """Pallas implementation of Normalize.forward for NCHW `x`."""
    N, C, H, W = x.shape
    rows = N * C
    hw = H * W
    itemsize = jnp.dtype(x.dtype).itemsize
    # Native packed tile height: 8 for f32, 16 for bf16, 32 for int8/fp8.
    sublane = max(8, 32 // itemsize)
    target = _tile_target_bytes()

    # ---- lane-dim (H*W) tile: full extent when modest, else multiple-of-128 chunks
    if hw <= 128:
        hw_tile = hw
    else:
        max_hw = (target // (sublane * itemsize) // 128) * 128
        hw_tile = min(hw, max(128, max_hw))
    num_hw_tiles = pl.cdiv(hw, hw_tile)

    # ---- sublane-dim (N*C) tile: fill the byte target, sublane-aligned
    row_budget = max(1, target // (hw_tile * itemsize))
    if row_budget >= rows:
        row_tile = rows                                   # full extent: always legal
    else:
        row_tile = min(rows, max(sublane, (row_budget // sublane) * sublane))
    num_row_tiles = pl.cdiv(rows, row_tile)

    # Megacore (v7x has 2 TCs): avoid a single-step grid when there is real work.
    if (num_row_tiles * num_hw_tiles == 1 and rows >= 2 * sublane
            and rows * hw * itemsize > (1 << 20)):
        row_tile = pl.cdiv(pl.cdiv(rows, 2), sublane) * sublane
        num_row_tiles = pl.cdiv(rows, row_tile)

    # ---- fold (x - mean)/std into per-row scale/bias, kept in float32
    mean = jnp.asarray(mean, dtype=jnp.float32).reshape(C)
    std = jnp.asarray(std, dtype=jnp.float32).reshape(C)
    scale = 1.0 / std                                     # (C,)
    bias = -mean / std                                    # (C,)
    rows_padded = num_row_tiles * row_tile                # keep in-kernel pl.ds in bounds
    scale_rows = jnp.tile(scale, N)                       # row r -> channel r % C
    bias_rows = jnp.tile(bias, N)
    if rows_padded > rows:
        pad = rows_padded - rows
        scale_rows = jnp.concatenate([scale_rows, jnp.zeros((pad,), jnp.float32)])
        bias_rows = jnp.concatenate([bias_rows, jnp.zeros((pad,), jnp.float32)])
    scale_rows = scale_rows.reshape(rows_padded, 1)
    bias_rows = bias_rows.reshape(rows_padded, 1)

    # Lane-dense 2D view (free for contiguous NCHW).
    x2 = x.reshape(rows, hw)

    # Explicit VMEM budget: 2 in + 2 out double-buffered tiles + resident consts.
    tile_bytes = row_tile * hw_tile * itemsize
    const_bytes = 2 * 2 * rows_padded * 128 * 4           # lane-padded, conservative
    vmem_need = 4 * tile_bytes + const_bytes + (4 << 20)
    vmem_limit = int(min(max(vmem_need, 16 << 20), 56 << 20))  # < v7x 64 MiB/TC

    grid_spec = pltpu.PrefetchScalarGridSpec(
        num_scalar_prefetch=0,
        grid=(num_row_tiles, num_hw_tiles),
        in_specs=[
            pl.BlockSpec((row_tile, hw_tile), lambda i, j: (i, j)),
            # Constant index_map -> copied into VMEM once, never re-DMA'd per step.
            pl.BlockSpec((rows_padded, 1), lambda i, j: (0, 0)),
            pl.BlockSpec((rows_padded, 1), lambda i, j: (0, 0)),
        ],
        out_specs=pl.BlockSpec((row_tile, hw_tile), lambda i, j: (i, j)),
    )

    cost = pl.CostEstimate(
        flops=2 * rows * hw,
        transcendentals=0,
        bytes_accessed=2 * rows * hw * itemsize + 2 * rows_padded * 4,
    )

    out2 = pl.pallas_call(
        _normalize_kernel,
        out_shape=jax.ShapeDtypeStruct((rows, hw), x.dtype),
        grid_spec=grid_spec,
        compiler_params=pltpu.CompilerParams(
            dimension_semantics=("parallel", "parallel"),
            vmem_limit_bytes=vmem_limit,
        ),
        cost_estimate=cost,
    )(x2, scale_rows, bias_rows)

    return out2.reshape(N, C, H, W)


if __name__ == "__main__":
    key = jax.random.PRNGKey(0)
    N, C, H, W = 2, 4, 16, 16

    x = jax.random.normal(key, (N, C, H, W), dtype=jnp.float32)
    # Per-channel mean / std as Python lists, mirroring the PyTorch constructor.
    mean = [0.485, 0.456, 0.406, 0.5]
    std = [0.229, 0.224, 0.225, 0.25]

    out = jax.block_until_ready(normalize(x, mean, std))

    # Reference (plain JAX, mirrors the PyTorch broadcast semantics).
    m = jnp.asarray(mean, jnp.float32)
    s = jnp.asarray(std, jnp.float32)
    ref = (x - m[:, None, None]) / s[:, None, None]

    assert out.shape == (N, C, H, W)
    # scale/bias refactor differs from true division only at ULP level.
    assert jnp.allclose(out, ref, atol=1e-5, rtol=1e-5)

    print("KERNEL_OK")
</pallas_src>

<mosaic_0001>
module attributes {stable_mosaic.version = 11 : i64} {
  func.func @_normalize_kernel(%arg0: i32, %arg1: i32, %arg2: memref<8x256xf32, #tpu.memory_space<vmem>>, %arg3: memref<8x1xf32, #tpu.memory_space<vmem>>, %arg4: memref<8x1xf32, #tpu.memory_space<vmem>>, %arg5: memref<8x256xf32, #tpu.memory_space<vmem>>) attributes {dimension_semantics = [#tpu.dimension_semantics<parallel>, #tpu.dimension_semantics<parallel>], iteration_bounds = array<i64: 1, 1>, scalar_prefetch = 0 : i64, scratch_operands = 0 : i64, tpu.core_type = #tpu.core_type<tc>, window_params = [{transform_indices = @transform_0, window_bounds = array<i64: 8, 256>}, {pipeline_mode = #tpu.pipeline_mode<synchronous>, transform_indices = @transform_1, window_bounds = array<i64: 8, 1>}, {pipeline_mode = #tpu.pipeline_mode<synchronous>, transform_indices = @transform_2, window_bounds = array<i64: 8, 1>}, {transform_indices = @transform_3, window_bounds = array<i64: 8, 256>}]} {
    %c8_i32 = arith.constant 8 : i32
    %0 = arith.muli %arg0, %c8_i32 : i32
    %1 = tpu.assume_multiple %0, 8 : i32
    %2 = arith.index_cast %1 : i32 to index
    %c0 = arith.constant 0 : index
    %3 = vector.load %arg3[%2, %c0] : memref<8x1xf32, #tpu.memory_space<vmem>>, vector<8x1xf32>
    %4 = arith.index_cast %1 : i32 to index
    %c0_0 = arith.constant 0 : index
    %5 = vector.load %arg4[%4, %c0_0] : memref<8x1xf32, #tpu.memory_space<vmem>>, vector<8x1xf32>
    %c0_1 = arith.constant 0 : index
    %c0_2 = arith.constant 0 : index
    %6 = vector.load %arg2[%c0_1, %c0_2] : memref<8x256xf32, #tpu.memory_space<vmem>>, vector<8x256xf32>
    %7 = vector.broadcast %3 : vector<8x1xf32> to vector<8x256xf32>
    %8 = arith.mulf %6, %7 : vector<8x256xf32>
    %9 = vector.broadcast %5 : vector<8x1xf32> to vector<8x256xf32>
    %10 = arith.addf %8, %9 : vector<8x256xf32>
    %c0_3 = arith.constant 0 : index
    %c0_4 = arith.constant 0 : index
    %11 = vector.load %arg5[%c0_3, %c0_4] : memref<8x256xf32, #tpu.memory_space<vmem>>, vector<8x256xf32>
    tpu.vector_store %arg5[%c0_3, %c0_4], %10 {strides = array<i32>} : memref<8x256xf32, #tpu.memory_space<vmem>>, vector<8x256xf32>,
    return
  }
  func.func @transform_0(%arg0: i32, %arg1: i32) -> (i32, i32) {
    %c0_i32 = arith.constant 0 : i32
    return %arg0, %arg1 : i32, i32
  }
  func.func @transform_1(%arg0: i32, %arg1: i32) -> (i32, i32) {
    %c0_i32 = arith.constant 0 : i32
    %c0_i32_0 = arith.constant 0 : i32
    %c0_i32_1 = arith.constant 0 : i32
    return %c0_i32, %c0_i32_0 : i32, i32
  }
  func.func @transform_2(%arg0: i32, %arg1: i32) -> (i32, i32) {
    %c0_i32 = arith.constant 0 : i32
    %c0_i32_0 = arith.constant 0 : i32
    %c0_i32_1 = arith.constant 0 : i32
    return %c0_i32, %c0_i32_0 : i32, i32
  }
  func.func @transform_3(%arg0: i32, %arg1: i32) -> (i32, i32) {
    %c0_i32 = arith.constant 0 : i32
    return %arg0, %arg1 : i32, i32
  }
}

</mosaic_0001>

<llo_original>
// kernel: tpu_custom_call.1
$region0: #{tpu_custom_call.1}
  #allocation0 [shape = 'u32[]', space=smem, size = 0x4, offset = 0x4, fixed_abs, tag = 'smem constant byte address 0x4 - core index']
  #allocation1 [shape = 'u32[144,128]{1,0:T(1,128)}', space=vmem, size = 0x12000, scoped, tag = 'internal scratch']
  %s0 = inlined_call_operand.vmem [shape: f32[8,256], index: 0, kind: input, shape index: {}]
  %s1 = inlined_call_operand.vmem [shape: f32[8,1], index: 1, kind: input, shape index: {}]
  %s2 = inlined_call_operand.vmem [shape: f32[8,1], index: 2, kind: input, shape index: {}]
  %s3 = inlined_call_operand.hbm [shape: f32[8,256], index: 3, kind: output, shape index: {}]
  %s4 = sld [smem:[#allocation0]]
  $region22: #{tpu_custom_call.1} parent=0
    _
  %s6 = ssub.s32 1, %s4
  %s7 = scalar_select 0, %s6, %s4
  $region1: #{tpu_custom_call.1} parent=0
    #allocation2 [shape = 'u8[8192]{0}', space=vmem, size = 0x2000, scoped, tag = 'output window, operand 0, single buffered']
    #allocation3 [shape = 's32[1]{0}', space=sflag, size = 0x4, scoped, tag = 'scoped memory for tpu_custom_call.1']
    %8 = vsyncpa [#allocation3], 0
    // Predicated region
    $region2: #{tpu_custom_call.1} parent=1 // pred_check
      _
    $region3: #{tpu_custom_call.1} parent=1 // pred_check_branch
      %10 = sbr.rel (0) target = $region5
    $region4: #{tpu_custom_call.1} parent=1 // pred_region
      _
    $region5: #{tpu_custom_call.1} parent=1 // pred_fallthru
      _
    // Predicated region
    $region6: #{tpu_custom_call.1} parent=1 // pred_check
      _
    $region7: #{tpu_custom_call.1} parent=1 // pred_check_branch
      %12 = sbr.rel (0) target = $region9
    $region8: #{tpu_custom_call.1} parent=1 // pred_region
      _
    $region9: #{tpu_custom_call.1} parent=1 // pred_fallthru
      _
    // Predicated region
    $region10: #{tpu_custom_call.1} parent=1 // pred_check
      _
    $region11: #{tpu_custom_call.1} parent=1 // pred_check_branch
      %14 = sbr.rel (0) target = $region13
    $region12: #{tpu_custom_call.1} parent=1 // pred_region
      _
    $region13: #{tpu_custom_call.1} parent=1 // pred_fallthru
      _
    %s15 = smul.u32 0, 8
    %s16 = scalar_lea.vmem %s1, %s15
    %v17 = vld [vmem:[%s16] sm:$0xff]
    %s18 = scalar_lea.vmem %s2, %s15
    %v19 = vld [vmem:[%s18] sm:$0xff]
    %v20 = vld [vmem:[%s0] sm:$0xff]
    %v21 = vld [vmem:[%s0 + $0x8] sm:$0xff]
    %23 = vset.pattern.permute.xlu0 0
    %24 = vperm.xlu0 %23, %v17
    %v25 = vpop.permute.xlu0 %24
    %v27 = vmul.f32 %v20, %v25
    %v28 = vmul.f32 %v21, %v25
    %30 = vset.pattern.permute.xlu0 0
    %31 = vperm.xlu0 %30, %v19
    %v32 = vpop.permute.xlu0 %31
    %v34 = vadd.f32 %v27, %v32
    %v35 = vadd.f32 %v28, %v32
    %36 = vst [vmem:[#allocation2] sm:$0xff] %v34
    %37 = vst [vmem:[#allocation2 + $0x8] sm:$0xff] %v35
    // Predicated region
    $region14: #{tpu_custom_call.1} parent=1 // pred_check
      _
    $region15: #{tpu_custom_call.1} parent=1 // pred_check_branch
      %39 = sbr.rel (0) target = $region17
    $region16: #{tpu_custom_call.1} parent=1 // pred_region
      %s41 = ssub.s32 256, 256
      %42 = vsyncadd [#allocation3], %s41
      %s44 = sshll.u32 [#allocation2], 4
      %s45 = int_to_ptr.vmem [resolvable:$true] %s44
      %47 = dma.vmem_to_hbm [thread:$0]  %s45, 256, %s3, [#allocation3]
    $region17: #{tpu_custom_call.1} parent=1 // pred_fallthru
      _
    // Predicated region
    $region18: #{tpu_custom_call.1} parent=1 // pred_check
      _
    $region19: #{tpu_custom_call.1} parent=1 // pred_check_branch
      %49 = sbr.rel (0) target = $region21
    $region20: #{tpu_custom_call.1} parent=1 // pred_region
      %50 = dma.done [#allocation3], 256
    $region21: #{tpu_custom_call.1} parent=1 // pred_fallthru
      _
    %51 = vsyncpa [#allocation3], 1

</llo_original>
